<compile_context>
chip_gen: v5e
topology: v5e:2x2
jax: 0.10.0
libtpu: 0.0.40
codegen_flags: <defaults>
</compile_context>

<pallas_src>
import functools

import jax
import jax.numpy as jnp
from jax import lax
from jax.experimental import pallas as pl
from jax.experimental.pallas import tpu as pltpu


def _uniform_rand_kernel(seed_ref, o_ref):
    """Fill o_ref with uniform [0, 1) values derived from seed_ref[0]."""
    shape = o_ref.shape

    # Per-element linear (row-major) index as uint32.
    idx = jnp.zeros(shape, dtype=jnp.uint32)
    stride = 1
    for d in reversed(range(len(shape))):
        idx = idx + lax.broadcasted_iota(jnp.uint32, shape, d) * jnp.uint32(stride)
        stride *= shape[d]

    seed = seed_ref[0].astype(jnp.uint32)

    # Mix counter with seed, then murmur3-style finalizer (shift/xor/mul only).
    x = (idx * jnp.uint32(0x9E3779B9)
         + seed * jnp.uint32(0x85EBCA6B)
         + jnp.uint32(0x27D4EB2F))
    x = x ^ (x >> jnp.uint32(16))
    x = x * jnp.uint32(0x7FEB352D)
    x = x ^ (x >> jnp.uint32(15))
    x = x * jnp.uint32(0x846CA68B)
    x = x ^ (x >> jnp.uint32(16))

    # Mantissa bit-trick: top 23 random bits -> float32 in [1, 2), minus 1.0.
    f = lax.bitcast_convert_type(
        (x >> jnp.uint32(9)) | jnp.uint32(0x3F800000), jnp.float32
    )
    # TODO(synk): for bf16/fp16 outputs, clamp just below 1.0 before the cast
    # so rounding cannot violate the [0, 1) contract.
    o_ref[...] = (f - jnp.float32(1.0)).astype(o_ref.dtype)


@functools.partial(jax.jit, static_argnames=("shape", "dtype"))
def _rand_uniform(seed_arr, shape, dtype):
    # Gridless call: full-array output block (exempt from the (8,128) rule),
    # seed lives in SMEM.  No has_side_effects: output is a real data output.
    return pl.pallas_call(
        _uniform_rand_kernel,
        out_shape=jax.ShapeDtypeStruct(shape, dtype),
        in_specs=[pl.BlockSpec(memory_space=pltpu.MemorySpace.SMEM)],
        out_specs=pl.BlockSpec(memory_space=pltpu.MemorySpace.VMEM),
    )(seed_arr)


def rand_like_pallas(x, seed):
    """Equivalent of torch.rand_like(x): uniform [0,1) with x's shape/dtype."""
    seed_arr = jnp.asarray(seed, dtype=jnp.int32).reshape((1,))
    return _rand_uniform(seed_arr, x.shape, jnp.dtype(x.dtype))


class Model:
    """JAX/Pallas port of the PyTorch `model`."""

    def __init__(self, key):
        # The PyTorch module stores nn.Parameter(torch.randn(1)) as the dropout
        # probability; it never affects the output.  Kept for shape fidelity.
        self.dropout_p = jax.random.normal(key, (1,), dtype=jnp.float32)
        self._calls = 0

    def __call__(self, x1, seed=None):
        # x2 = dropout(x1) -> discarded in the reference forward (dead code).
        if seed is None:
            # Fresh draws per call, matching torch.rand_like semantics.
            seed = self._calls
            self._calls += 1
        return rand_like_pallas(x1, seed)


if __name__ == "__main__":
    key = jax.random.PRNGKey(0)
    k_param, k_input = jax.random.split(key)

    m = Model(k_param)

    # Matches the module's implied input: torch.randn(1, 2, 2)
    x1 = jax.random.normal(k_input, (1, 2, 2), dtype=jnp.float32)

    out = m(x1, seed=0)
    out = jax.block_until_ready(out)

    assert out.shape == x1.shape, (out.shape, x1.shape)
    assert out.dtype == x1.dtype, (out.dtype, x1.dtype)
    assert bool(jnp.all((out >= 0.0) & (out < 1.0)))

    # Different seeds give different draws.
    out2 = jax.block_until_ready(m(x1, seed=1))
    assert bool(jnp.any(out2 != out))

    print("KERNEL_OK")
</pallas_src>

<mosaic_0001>
module attributes {stable_mosaic.version = 11 : i64} {
  func.func @_uniform_rand_kernel(%arg0: memref<1xi32, #tpu.memory_space<smem>>, %arg1: memref<1x2x2xf32, #tpu.memory_space<vmem>>) attributes {dimension_semantics = [], scalar_prefetch = 0 : i64, scratch_operands = 0 : i64, tpu.core_type = #tpu.core_type<tc>} {
    %c0_i32 = arith.constant 0 : i32
    %0 = vector.broadcast %c0_i32 : i32 to vector<1x2x2xi32>
    %1 = tpu.iota {dimensions = array<i32: 2>} : vector<1x2x2xi32>
    %c1_i32 = arith.constant 1 : i32
    %2 = vector.broadcast %c1_i32 : i32 to vector<1x2x2xi32>
    %3 = arith.muli %1, %2 : vector<1x2x2xi32>
    %4 = arith.addi %0, %3 : vector<1x2x2xi32>
    %5 = tpu.iota {dimensions = array<i32: 1>} : vector<1x2x2xi32>
    %c2_i32 = arith.constant 2 : i32
    %6 = vector.broadcast %c2_i32 : i32 to vector<1x2x2xi32>
    %7 = arith.muli %5, %6 : vector<1x2x2xi32>
    %8 = arith.addi %4, %7 : vector<1x2x2xi32>
    %9 = tpu.iota {dimensions = array<i32: 0>} : vector<1x2x2xi32>
    %c4_i32 = arith.constant 4 : i32
    %10 = vector.broadcast %c4_i32 : i32 to vector<1x2x2xi32>
    %11 = arith.muli %9, %10 : vector<1x2x2xi32>
    %12 = arith.addi %8, %11 : vector<1x2x2xi32>
    %c0 = arith.constant 0 : index
    %13 = memref.load %arg0[%c0] : memref<1xi32, #tpu.memory_space<smem>>
    %c-1640531527_i32 = arith.constant -1640531527 : i32
    %14 = vector.broadcast %c-1640531527_i32 : i32 to vector<1x2x2xi32>
    %15 = arith.muli %12, %14 : vector<1x2x2xi32>
    %c-2048144789_i32 = arith.constant -2048144789 : i32
    %16 = arith.muli %13, %c-2048144789_i32 : i32
    %17 = vector.broadcast %16 : i32 to vector<1x2x2xi32>
    %18 = arith.addi %15, %17 : vector<1x2x2xi32>
    %c668265263_i32 = arith.constant 668265263 : i32
    %19 = vector.broadcast %c668265263_i32 : i32 to vector<1x2x2xi32>
    %20 = arith.addi %18, %19 : vector<1x2x2xi32>
    %c16_i32 = arith.constant 16 : i32
    %21 = vector.broadcast %c16_i32 : i32 to vector<1x2x2xi32>
    %22 = arith.shrui %20, %21 : vector<1x2x2xi32>
    %23 = arith.xori %20, %22 : vector<1x2x2xi32>
    %c2146121005_i32 = arith.constant 2146121005 : i32
    %24 = vector.broadcast %c2146121005_i32 : i32 to vector<1x2x2xi32>
    %25 = arith.muli %23, %24 : vector<1x2x2xi32>
    %c15_i32 = arith.constant 15 : i32
    %26 = vector.broadcast %c15_i32 : i32 to vector<1x2x2xi32>
    %27 = arith.shrui %25, %26 : vector<1x2x2xi32>
    %28 = arith.xori %25, %27 : vector<1x2x2xi32>
    %c-2073254261_i32 = arith.constant -2073254261 : i32
    %29 = vector.broadcast %c-2073254261_i32 : i32 to vector<1x2x2xi32>
    %30 = arith.muli %28, %29 : vector<1x2x2xi32>
    %c16_i32_0 = arith.constant 16 : i32
    %31 = vector.broadcast %c16_i32_0 : i32 to vector<1x2x2xi32>
    %32 = arith.shrui %30, %31 : vector<1x2x2xi32>
    %33 = arith.xori %30, %32 : vector<1x2x2xi32>
    %c9_i32 = arith.constant 9 : i32
    %34 = vector.broadcast %c9_i32 : i32 to vector<1x2x2xi32>
    %35 = arith.shrui %33, %34 : vector<1x2x2xi32>
    %c1065353216_i32 = arith.constant 1065353216 : i32
    %36 = vector.broadcast %c1065353216_i32 : i32 to vector<1x2x2xi32>
    %37 = arith.ori %35, %36 : vector<1x2x2xi32>
    %38 = tpu.bitcast %37 : vector<1x2x2xi32> -> vector<1x2x2xf32>
    %cst = arith.constant 1.000000e+00 : f32
    %39 = vector.broadcast %cst : f32 to vector<1x2x2xf32>
    %40 = arith.subf %38, %39 : vector<1x2x2xf32>
    %c0_1 = arith.constant 0 : index
    %c0_2 = arith.constant 0 : index
    %c0_3 = arith.constant 0 : index
    %41 = vector.load %arg1[%c0_1, %c0_2, %c0_3] : memref<1x2x2xf32, #tpu.memory_space<vmem>>, vector<1x2x2xf32>
    tpu.vector_store %arg1[%c0_1, %c0_2, %c0_3], %40 {strides = array<i32>} : memref<1x2x2xf32, #tpu.memory_space<vmem>>, vector<1x2x2xf32>,
    return
  }
}

</mosaic_0001>

<llo_original>
// kernel: _rand_uniform.1
$region0: #{_rand_uniform.1}
  #allocation0 [shape = 'u32[]', space=smem, size = 0x4, offset = 0x4, fixed_abs, tag = 'smem constant byte address 0x4 - core index']
  #allocation1 [shape = 'u32[72,128]{1,0:T(1,128)}', space=vmem, size = 0x9000, scoped, tag = 'internal scratch']
  #allocation2 [shape = 's32[1]{0:T(128)S(6)}', space=smem, size = 0x200, scoped, tag = 'scoped memory for _rand_uniform.1']
  %s0 = inlined_call_operand.<no memory space> [shape: s32[1], index: 0, kind: input, shape index: {}]
  %s1 = inlined_call_operand.hbm [shape: f32[1,2,2], index: 1, kind: output, shape index: {}]
  %s2 = sld [smem:[#allocation0]]
  $region14: #{_rand_uniform.1} parent=0
    _
  %s4 = ssub.s32 1, %s2
  %s5 = scalar_select 0, %s4, %s2
  %6 = sst [smem:[#allocation2]] %s0
  $region1: #{_rand_uniform.1} parent=0
    #allocation3 [shape = 'u8[1024]{0}', space=vmem, size = 0x400, scoped, tag = 'output window, operand 0, single buffered']
    #allocation4 [shape = 's32[1]{0}', space=sflag, size = 0x4, scoped, tag = 'scoped memory for _rand_uniform.1']
    %7 = vsyncpa [#allocation4], 0
    // Predicated region
    $region2: #{_rand_uniform.1} parent=1 // pred_check
      _
    $region3: #{_rand_uniform.1} parent=1 // pred_check_branch
      %9 = sbr.rel (0) target = $region5
    $region4: #{_rand_uniform.1} parent=1 // pred_region
      _
    $region5: #{_rand_uniform.1} parent=1 // pred_fallthru
      _
    %v10 = vlaneseq
    %v11 = vand.u32 %v10, 127
    %v12 = vlaneseq
    %v13 = vshrl.u32 %v12, 7
    %v14 = vmul.u32 %v13, 2
    %v15 = vadd.s32 %v11, %v14
    %s16 = sld [smem:[#allocation2]]
    %v17 = vmul.u32 %v15, 2654435769
    %s18 = smul.u32 %s16, 2246822507
    %v19 = vstv %s18
    %v20 = vadd.s32 %v17, %v19
    %v21 = vadd.s32 %v20, 668265263
    %v22 = vshrl.u32 %v21, 16
    %v23 = vxor.u32 %v21, %v22
    %v24 = vmul.u32 %v23, 2146121005
    %v25 = vshrl.u32 %v24, 15
    %v26 = vxor.u32 %v24, %v25
    %v27 = vmul.u32 %v26, 2221713035
    %v28 = vshrl.u32 %v27, 16
    %v29 = vxor.u32 %v27, %v28
    %v30 = vshrl.u32 %v29, 9
    %v31 = vor.u32 %v30, 1065353216
    %v33 = vsub.f32 %v31, 1.0
    %vm34 = vcmask 9216
    %35 = vst.msk [vmem:[#allocation3] sm:$0x3] %vm34, %v33
    // Predicated region
    $region6: #{_rand_uniform.1} parent=1 // pred_check
      _
    $region7: #{_rand_uniform.1} parent=1 // pred_check_branch
      %37 = sbr.rel (0) target = $region9
    $region8: #{_rand_uniform.1} parent=1 // pred_region
      %39 = vsyncadd [#allocation4], 0
      %s41 = sshll.u32 [#allocation3], 4
      %s42 = int_to_ptr.vmem [resolvable:$true] %s41
      %s43 = sshll.u32 %s1, 4
      %s44 = int_to_ptr.hbm [resolvable:$true] %s43
      %46 = dma.vmem_to_hbm [thread:$0]  %s42, 32, %s44, [#allocation4]
    $region9: #{_rand_uniform.1} parent=1 // pred_fallthru
      _
    // Predicated region
    $region10: #{_rand_uniform.1} parent=1 // pred_check
      _
    $region11: #{_rand_uniform.1} parent=1 // pred_check_branch
      %48 = sbr.rel (0) target = $region13
    $region12: #{_rand_uniform.1} parent=1 // pred_region
      %50 = dma.done [#allocation4], 32
    $region13: #{_rand_uniform.1} parent=1 // pred_fallthru
      _
    %51 = vsyncpa [#allocation4], 1

</llo_original>
